<compile_context>
chip_gen: v6e
topology: v6e:2x2x1
jax: 0.10.0
libtpu: 0.0.40
codegen_flags: <defaults>
</compile_context>

<pallas_src>
import functools

import numpy as np
import jax
import jax.numpy as jnp
from jax.experimental import pallas as pl
from jax.experimental.pallas import tpu as pltpu


# ----------------------------- Pallas kernel ---------------------------------

def _fin_kernel(tok_ref, x_ref, o_ref, *, learned_start):
    """Builds one (row_tile, V) slab of `fin` for one batch element.

    tok_ref : (row_tile, 1) int32 -- token id per output row; -1 marks learned rows
    x_ref   : (T, V)        f32   -- perturbed learned logits (normu + gumbel), batch b
    o_ref   : (row_tile, V)       -- output rows of fin (bf16)
    """
    row_tile, vocab = o_ref.shape
    n_learned = x_ref.shape[0]
    s0 = pl.program_id(1) * row_tile                         # first output row of block

    # Hard gumbel-softmax forward of the learned slab: first-argmax per row.
    # (tau > 0 rescaling and the straight-through soft term do not change the
    #  forward one-hot value, so only the argmax index is needed.)
    y = x_ref[...]                                           # (T, V) f32
    row_max = jnp.max(y, axis=-1, keepdims=True)             # (T, 1)
    lane_t = jax.lax.broadcasted_iota(jnp.int32, y.shape, 1)
    learned_idx = jnp.min(jnp.where(y == row_max, lane_t, vocab),
                          axis=-1, keepdims=True)            # (T, 1) first max index

    # Per-row token id for this block: constants come from the table, learned rows
    # get their argmax index.  `li == t` only ever matches a learned row, so the
    # tiny static select loop (T iterations on a (row_tile, 1) vector) is exact.
    tok = tok_ref[...]                                       # (row_tile, 1) int32
    row_i = jax.lax.broadcasted_iota(jnp.int32, (row_tile, 1), 0)
    li = s0 + row_i - learned_start                          # slab row per output row
    for t in range(n_learned):                               # static, trivial cost
        tok = jnp.where(li == t, learned_idx[t:t + 1, :], tok)

    # One lane-dense store of the merged one-hot rows.
    lanes = jax.lax.broadcasted_iota(jnp.int32, (row_tile, vocab), 1)
    o_ref[...] = (lanes == tok).astype(o_ref.dtype)


# ----------------------------- pallas_call wrapper ----------------------------

def pars_fin(perturbed, row_tok_col, *, seq_len, learned_start, row_tile,
             out_dtype=jnp.bfloat16):
    """perturbed: (B, T, V) f32 learned logits + gumbel noise.
    row_tok_col: (n_blocks*row_tile, 1) int32 per-row token id (-1 = learned row).
    Returns fin: (B, seq_len, V) one-hot rows in `out_dtype`."""
    B, T, V = perturbed.shape
    n_blocks = row_tok_col.shape[0] // row_tile

    kernel = functools.partial(_fin_kernel, learned_start=learned_start)

    out_bytes = B * seq_len * V * jnp.dtype(out_dtype).itemsize
    in_bytes = perturbed.size * perturbed.dtype.itemsize + row_tok_col.size * 4

    return pl.pallas_call(
        kernel,
        out_shape=jax.ShapeDtypeStruct((B, seq_len, V), out_dtype),
        grid=(B, n_blocks),
        in_specs=[
            # tiny per-row token table, shared across the batch
            pl.BlockSpec((row_tile, 1), lambda b, r: (r, 0)),
            # perturbed learned-logit slab for batch b; block index is constant
            # across r so it stays resident.  For very large many_tokens consider
            # pipeline_mode=pl.Buffered(1) (or narrowing it to the overlapping
            # rows) to halve its VMEM footprint on v7x's 64 MiB VMEM.
            pl.BlockSpec((None, T, V), lambda b, r: (b, 0, 0)),
        ],
        # Lane-dense (1, row_tile, V) output blocks written straight into the exact
        # (B, seq_len, V) result; the ragged last row-block is masked by Pallas.
        out_specs=pl.BlockSpec((None, row_tile, V), lambda b, r: (b, r, 0)),
        compiler_params=pltpu.CompilerParams(
            dimension_semantics=("parallel", "parallel"),
            # footprint is a few MB/step; 32 MiB is safe on v5e/v6e and v7x (64 MiB)
            vmem_limit_bytes=32 * 1024 * 1024,
        ),
        cost_estimate=pl.CostEstimate(
            flops=int(B * (n_blocks * T * V + seq_len * V)),   # compares / selects
            transcendentals=0,
            bytes_accessed=int(out_bytes + in_bytes)),
    )(row_tok_col, perturbed)


def _forward_impl(normu, key, row_tok_col, *, seq_len, learned_start, row_tile,
                  out_dtype):
    # Gumbel noise via jax.random (fused by XLA into the add).  tau only rescales
    # uniformly, so the hard forward value is one_hot(argmax(normu + g)).
    g = jax.random.gumbel(key, normu.shape, dtype=normu.dtype)
    return pars_fin(normu + g, row_tok_col, seq_len=seq_len,
                    learned_start=learned_start, row_tile=row_tile,
                    out_dtype=out_dtype)


# ----------------------------- Module wrapper ---------------------------------

class ParsPallas:
    """JAX/Pallas port of Pars.  vocab / seq_len / special tokens are parameters so
    the demo runs at small shapes; the real module uses vocab=49408, seq_len=77,
    start_tok=49406, pad_tok=49407."""

    def __init__(self, batch_size, many_tokens, prompt, *, vocab=49408, seq_len=77,
                 start_tok=None, pad_tok=None, row_tile=40,
                 out_dtype=jnp.bfloat16, key=None):
        start_tok = vocab - 2 if start_tok is None else start_tok
        pad_tok = vocab - 1 if pad_tok is None else pad_tok
        prompt = [int(p) for p in prompt]
        pad_len = seq_len - (many_tokens + len(prompt) + 1)
        assert pad_len >= 0, "sequence too short for start + prompt + learned tokens"

        self.much_hard = 1000.0            # tau; does not change the hard forward value
        self.seq_len = seq_len
        self._learned_start = learned_start = 1 + len(prompt)
        self._many_tokens = many_tokens
        self._start_tok, self._pad_tok, self._prompt = start_tok, pad_tok, prompt

        # Row-block size: multiple of 8, no larger than the 8-aligned sequence length
        # (avoids oversized blocks at small demo shapes); >= 2 grid steps at real scale.
        row_tile = max(8, (int(row_tile) + 7) // 8 * 8)
        row_tile = min(row_tile, (seq_len + 7) // 8 * 8)
        n_blocks = (seq_len + row_tile - 1) // row_tile
        self._row_tile = row_tile

        if key is None:
            key = jax.random.PRNGKey(0)
        k_param, self._key = jax.random.split(key)

        # st = torch.zeros(B, T, V).normal_()
        self.normu = jax.random.normal(
            k_param, (batch_size, many_tokens, vocab), dtype=jnp.float32)

        # Per-row token table: start / prompt / pad ids, -1 marks the learned rows.
        # Rows past seq_len only exist so the last block's table read is in-bounds;
        # the corresponding output rows are masked by Pallas (out_shape is exact).
        tbl = np.full((n_blocks * row_tile,), pad_tok, dtype=np.int32)
        tbl[0] = start_tok
        tbl[1:1 + len(prompt)] = np.asarray(prompt, dtype=np.int32)
        tbl[learned_start:learned_start + many_tokens] = -1
        self._row_tok = jnp.asarray(tbl).reshape(-1, 1)

        self._fwd = jax.jit(functools.partial(
            _forward_impl, seq_len=seq_len, learned_start=learned_start,
            row_tile=row_tile, out_dtype=out_dtype))
        self._last_key = None

    def forward(self):
        self._key, sub = jax.random.split(self._key)   # fresh noise every call
        self._last_key = sub                            # exposed so tests can rebuild it
        return self._fwd(self.normu, sub, self._row_tok)


# ----------------------------------- demo -------------------------------------

if __name__ == "__main__":
    key = jax.random.PRNGKey(0)

    # Small shapes consistent with the module structure:
    #   batch=2, many_tokens=4, prompt length=3, vocab=512 (stands in for 49408),
    #   seq_len=16 (stands in for 77) -> pad length = 16 - (4 + 3 + 1) = 8.
    batch_size, many_tokens = 2, 4
    vocab, seq_len = 512, 16
    prompt = [5, 17, 42]
    start_tok, pad_tok = vocab - 2, vocab - 1

    model = ParsPallas(batch_size, many_tokens, prompt, vocab=vocab, seq_len=seq_len,
                       start_tok=start_tok, pad_tok=pad_tok, key=key)
    fin = jax.block_until_ready(model.forward())

    # Structural checks: every row is exactly one-hot.
    assert fin.shape == (batch_size, seq_len, vocab), fin.shape
    assert fin.dtype == jnp.bfloat16
    fin32 = fin.astype(jnp.float32)
    assert bool(jnp.all(jnp.sum(fin32, axis=-1) == 1.0))
    assert bool(jnp.all(jnp.max(fin32, axis=-1) == 1.0))

    # Constant rows: start / prompt / pad.
    assert bool(jnp.all(fin32[:, 0, start_tok] == 1.0))
    for jk, pt in enumerate(prompt):
        assert bool(jnp.all(fin32[:, 1 + jk, pt] == 1.0))
    ls = 1 + len(prompt)
    assert bool(jnp.all(fin32[:, ls + many_tokens:, pad_tok] == 1.0))

    # Learned rows match the hard gumbel-softmax forward value,
    # one_hot(argmax(normu + g)), using the exact noise the kernel call drew.
    g = jax.random.gumbel(model._last_key, model.normu.shape, dtype=jnp.float32)
    ref_idx = jnp.argmax(model.normu + g, axis=-1)
    got_idx = jnp.argmax(fin32[:, ls:ls + many_tokens, :], axis=-1)
    assert bool(jnp.array_equal(got_idx, ref_idx))

    # Second call resamples the noise (key advances per call).
    _ = jax.block_until_ready(model.forward())

    print("KERNEL_OK")
</pallas_src>

<mosaic_0001>
module attributes {stable_mosaic.version = 11 : i64} {
  func.func @_fin_kernel(%arg0: i32, %arg1: i32, %arg2: memref<16x1xi32, #tpu.memory_space<vmem>>, %arg3: memref<1x4x512xf32, #tpu.memory_space<vmem>>, %arg4: memref<1x16x512xbf16, #tpu.memory_space<vmem>>) attributes {dimension_semantics = [#tpu.dimension_semantics<parallel>, #tpu.dimension_semantics<parallel>], iteration_bounds = array<i64: 2, 1>, scalar_prefetch = 0 : i64, scratch_operands = 0 : i64, tpu.core_type = #tpu.core_type<tc>, window_params = [{transform_indices = @transform_0, window_bounds = array<i64: 16, 1>}, {transform_indices = @transform_1, window_bounds = array<i64: 1, 4, 512>}, {transform_indices = @transform_2, window_bounds = array<i64: 1, 16, 512>}]} {
    %c16_i32 = arith.constant 16 : i32
    %0 = arith.muli %arg1, %c16_i32 : i32
    %c0 = arith.constant 0 : index
    %c0_0 = arith.constant 0 : index
    %c0_1 = arith.constant 0 : index
    %1 = vector.load %arg3[%c0, %c0_0, %c0_1] : memref<1x4x512xf32, #tpu.memory_space<vmem>>, vector<1x4x512xf32>
    %2 = vector.shape_cast %1 : vector<1x4x512xf32> to vector<4x512xf32>
    %cst = arith.constant dense<0xFF800000> : vector<4xf32>
    %3 = vector.multi_reduction <maximumf>, %2, %cst [1] : vector<4x512xf32> to vector<4xf32>
    %4 = vector.shape_cast %3 : vector<4xf32> to vector<4x1xf32>
    %5 = tpu.iota {dimensions = array<i32: 1>} : vector<4x512xi32>
    %6 = vector.broadcast %4 : vector<4x1xf32> to vector<4x512xf32>
    %7 = arith.cmpf oeq, %2, %6 : vector<4x512xf32>
    %c512_i32 = arith.constant 512 : i32
    %8 = vector.broadcast %c512_i32 : i32 to vector<4x512xi32>
    %9 = arith.select %7, %5, %8 : vector<4x512xi1>, vector<4x512xi32>
    %cst_2 = arith.constant dense<2147483647> : vector<4xi32>
    %10 = vector.multi_reduction <minsi>, %9, %cst_2 [1] : vector<4x512xi32> to vector<4xi32>
    %11 = vector.shape_cast %10 : vector<4xi32> to vector<4x1xi32>
    %c0_3 = arith.constant 0 : index
    %c0_4 = arith.constant 0 : index
    %12 = vector.load %arg2[%c0_3, %c0_4] : memref<16x1xi32, #tpu.memory_space<vmem>>, vector<16x1xi32>
    %13 = tpu.iota {dimensions = array<i32: 0>} : vector<16x1xi32>
    %14 = vector.broadcast %0 : i32 to vector<16x1xi32>
    %15 = arith.addi %14, %13 : vector<16x1xi32>
    %c4_i32 = arith.constant 4 : i32
    %16 = vector.broadcast %c4_i32 : i32 to vector<16x1xi32>
    %17 = arith.subi %15, %16 : vector<16x1xi32>
    %c0_i32 = arith.constant 0 : i32
    %18 = vector.broadcast %c0_i32 : i32 to vector<16x1xi32>
    %19 = arith.cmpi eq, %17, %18 : vector<16x1xi32>
    %20 = vector.extract_strided_slice %11 {offsets = [0, 0], sizes = [1, 1], strides = [1, 1]} : vector<4x1xi32> to vector<1x1xi32>
    %21 = vector.shape_cast %20 : vector<1x1xi32> to vector<1x1xi32>
    %22 = vector.broadcast %21 : vector<1x1xi32> to vector<16x1xi32>
    %23 = arith.select %19, %22, %12 : vector<16x1xi1>, vector<16x1xi32>
    %c1_i32 = arith.constant 1 : i32
    %24 = vector.broadcast %c1_i32 : i32 to vector<16x1xi32>
    %25 = arith.cmpi eq, %17, %24 : vector<16x1xi32>
    %26 = vector.extract_strided_slice %11 {offsets = [1, 0], sizes = [1, 1], strides = [1, 1]} : vector<4x1xi32> to vector<1x1xi32>
    %27 = vector.shape_cast %26 : vector<1x1xi32> to vector<1x1xi32>
    %28 = vector.broadcast %27 : vector<1x1xi32> to vector<16x1xi32>
    %29 = arith.select %25, %28, %23 : vector<16x1xi1>, vector<16x1xi32>
    %c2_i32 = arith.constant 2 : i32
    %30 = vector.broadcast %c2_i32 : i32 to vector<16x1xi32>
    %31 = arith.cmpi eq, %17, %30 : vector<16x1xi32>
    %32 = vector.extract_strided_slice %11 {offsets = [2, 0], sizes = [1, 1], strides = [1, 1]} : vector<4x1xi32> to vector<1x1xi32>
    %33 = vector.shape_cast %32 : vector<1x1xi32> to vector<1x1xi32>
    %34 = vector.broadcast %33 : vector<1x1xi32> to vector<16x1xi32>
    %35 = arith.select %31, %34, %29 : vector<16x1xi1>, vector<16x1xi32>
    %c3_i32 = arith.constant 3 : i32
    %36 = vector.broadcast %c3_i32 : i32 to vector<16x1xi32>
    %37 = arith.cmpi eq, %17, %36 : vector<16x1xi32>
    %38 = vector.extract_strided_slice %11 {offsets = [3, 0], sizes = [1, 1], strides = [1, 1]} : vector<4x1xi32> to vector<1x1xi32>
    %39 = vector.shape_cast %38 : vector<1x1xi32> to vector<1x1xi32>
    %40 = vector.broadcast %39 : vector<1x1xi32> to vector<16x1xi32>
    %41 = arith.select %37, %40, %35 : vector<16x1xi1>, vector<16x1xi32>
    %42 = tpu.iota {dimensions = array<i32: 1>} : vector<16x512xi32>
    %43 = vector.broadcast %41 : vector<16x1xi32> to vector<16x512xi32>
    %44 = arith.cmpi eq, %42, %43 : vector<16x512xi32>
    %45 = arith.extui %44 : vector<16x512xi1> to vector<16x512xi32>
    %46 = arith.sitofp %45 : vector<16x512xi32> to vector<16x512xf32>
    %47 = arith.truncf %46 : vector<16x512xf32> to vector<16x512xbf16>
    %c0_5 = arith.constant 0 : index
    %c0_6 = arith.constant 0 : index
    %c0_7 = arith.constant 0 : index
    %48 = vector.load %arg4[%c0_5, %c0_6, %c0_7] : memref<1x16x512xbf16, #tpu.memory_space<vmem>>, vector<1x16x512xbf16>
    %49 = vector.shape_cast %48 : vector<1x16x512xbf16> to vector<16x512xbf16>
    %50 = vector.shape_cast %47 : vector<16x512xbf16> to vector<1x16x512xbf16>
    tpu.vector_store %arg4[%c0_5, %c0_6, %c0_7], %50 {strides = array<i32>} : memref<1x16x512xbf16, #tpu.memory_space<vmem>>, vector<1x16x512xbf16>,
    return
  }
  func.func @transform_0(%arg0: i32, %arg1: i32) -> (i32, i32) {
    %c0_i32 = arith.constant 0 : i32
    %c0_i32_0 = arith.constant 0 : i32
    return %arg1, %c0_i32 : i32, i32
  }
  func.func @transform_1(%arg0: i32, %arg1: i32) -> (i32, i32, i32) {
    %c0_i32 = arith.constant 0 : i32
    %c0_i32_0 = arith.constant 0 : i32
    %c0_i32_1 = arith.constant 0 : i32
    return %arg0, %c0_i32, %c0_i32_0 : i32, i32, i32
  }
  func.func @transform_2(%arg0: i32, %arg1: i32) -> (i32, i32, i32) {
    %c0_i32 = arith.constant 0 : i32
    %c0_i32_0 = arith.constant 0 : i32
    return %arg0, %arg1, %c0_i32 : i32, i32, i32
  }
}

</mosaic_0001>

<llo_original>
// kernel: _forward_impl.1
$region0: #{_forward_impl.1}
  #allocation0 [shape = 'u32[]', space=smem, size = 0x4, offset = 0x4, fixed_abs, tag = 'smem constant byte address 0x4 - core index']
  #allocation1 [shape = 'u32[144,128]{1,0:T(1,128)}', space=vmem, size = 0x12000, scoped, tag = 'internal scratch']
  %s0 = inlined_call_operand.vmem [shape: s32[16,1], index: 0, kind: input, shape index: {}]
  %s1 = inlined_call_operand.vmem [shape: f32[2,4,512], index: 1, kind: input, shape index: {}]
  %s2 = inlined_call_operand.hbm [shape: bf16[2,16,512], index: 2, kind: output, shape index: {}]
  %s3 = sld [smem:[#allocation0]]
  $region41: #{_forward_impl.1} parent=0
    _
  %s5 = ssub.s32 1, %s3
  %s6 = scalar_select 0, %s5, %s3
  $region1: #{_forward_impl.1} parent=0
    #allocation2 [shape = 'u8[32768]{0}', space=vmem, size = 0x8000, scoped, tag = 'output window, operand 0']
    #allocation3 [shape = 's32[2]{0}', space=sflag, size = 0x8, scoped, tag = 'scoped memory for _forward_impl.1']
    %7 = vsyncpa [#allocation3], 0
    %s8 = scalar_lea.sflag [#allocation3], 1
    %9 = vsyncpa %s8, 0
    loop: start=0, step=1, limit=4
    $region2: #{_forward_impl.1} parent=1 // loop_pre_header
      _
    $region3: #{_forward_impl.1} parent=1 // loop_header
      %s11 = sphi 0, %s15
      %p12 = scmp.ge.s32.totalorder %s11, 4
      %s18 = sphi 0, %s30
      %s19 = sphi 0, %s26
      %s20 = sphi 0, %s18
      %s21 = sphi 0, %s19
      %s22 = sphi 0, %s20
      %s23 = sphi 0, %s21
      %s33 = sphi 0, %s35
      %s36 = sphi 0, %s33
      %s37 = sphi 0, %s36
      %s53 = sphi 0, %s37
      %s59 = sphi 0, %s61
      %s62 = sphi 0, %s59
      %s63 = sphi 0, %s62
      %s79 = sphi 0, %s63
      %s87 = sphi 0, %s89
      %s90 = sphi 0, %s87
      %s91 = sphi 0, %s90
      %s107 = sphi 0, %s91
    $region4: #{_forward_impl.1} parent=1 // loop_header_branch
      %14 = sbr.rel (%p12) target = $region8
    $region5: #{_forward_impl.1} parent=1 // loop_body
      %s16 = ssub.s32 %s11, 1
      %s17 = ssub.s32 %s11, 2
      %s24 = sadd.s32 1, %s19
      %p25 = scmp.ge.s32.totalorder %s24, 1
      %s26 = scalar_select %p25, 0, %s24
      %s27 = sadd.s32 1, %s18
      %s28 = scalar_select %p25, %s27, %s18
      %p29 = scmp.ge.s32.totalorder %s28, 2
      %s30 = scalar_select %p29, 0, %s28
      %s31 = ssub.s32 %s19, %s26
      %p32 = scmp.eq.s32.totalorder %s31, 0
      %s34 = sadd.s32 %s33, 1
      %s35 = scalar_select %p32, %s33, %s34
      %p38 = pneg %p32
      %p39 = scmp.eq.s32.totalorder %s11, 1
      %p40 = por %p38, %p39
      %p41 = scmp.ne.s32.totalorder %s33, %s36
      %p42 = scmp.eq.s32.totalorder %s11, 0
      %p43 = por %p41, %p42
      %p44 = scmp.ne.s32.totalorder %s33, %s36
      %p45 = scmp.eq.s32.totalorder %s16, 1
      %p46 = por %p44, %p45
      %p47 = scmp.ne.s32.totalorder %s36, %s37
      %p48 = scmp.eq.s32.totalorder %s16, 0
      %p49 = por %p47, %p48
      %p50 = scmp.ne.s32.totalorder %s36, %s37
      %p51 = scmp.eq.s32.totalorder %s17, 1
      %p52 = por %p50, %p51
      %p54 = scmp.ne.s32.totalorder %s37, %s53
      %p55 = scmp.eq.s32.totalorder %s17, 0
      %p56 = por %p54, %p55
      %s57 = ssub.s32 %s18, %s30
      %p58 = scmp.eq.s32.totalorder %s57, 0
      %s60 = sadd.s32 %s59, 1
      %s61 = scalar_select %p58, %s59, %s60
      %p64 = pneg %p58
      %p65 = scmp.eq.s32.totalorder %s11, 1
      %p66 = por %p64, %p65
      %p67 = scmp.ne.s32.totalorder %s59, %s62
      %p68 = scmp.eq.s32.totalorder %s11, 0
      %p69 = por %p67, %p68
      %p70 = scmp.ne.s32.totalorder %s59, %s62
      %p71 = scmp.eq.s32.totalorder %s16, 1
      %p72 = por %p70, %p71
      %p73 = scmp.ne.s32.totalorder %s62, %s63
      %p74 = scmp.eq.s32.totalorder %s16, 0
      %p75 = por %p73, %p74
      %p76 = scmp.ne.s32.totalorder %s62, %s63
      %p77 = scmp.eq.s32.totalorder %s17, 1
      %p78 = por %p76, %p77
      %p80 = scmp.ne.s32.totalorder %s63, %s79
      %p81 = scmp.eq.s32.totalorder %s17, 0
      %p82 = por %p80, %p81
      %s83 = ssub.s32 %s18, %s30
      %s84 = ssub.s32 %s19, %s26
      %s85 = sor.u32 %s83, %s84
      %p86 = scmp.eq.s32.totalorder %s85, 0
      %s88 = sadd.s32 %s87, 1
      %s89 = scalar_select %p86, %s87, %s88
      %p92 = pneg %p86
      %p93 = scmp.eq.s32.totalorder %s11, 1
      %p94 = por %p92, %p93
      %p95 = scmp.ne.s32.totalorder %s87, %s90
      %p96 = scmp.eq.s32.totalorder %s11, 0
      %p97 = por %p95, %p96
      %p98 = scmp.ne.s32.totalorder %s87, %s90
      %p99 = scmp.eq.s32.totalorder %s16, 1
      %p100 = por %p98, %p99
      %p101 = scmp.ne.s32.totalorder %s90, %s91
      %p102 = scmp.eq.s32.totalorder %s16, 0
      %p103 = por %p101, %p102
      %p104 = scmp.ne.s32.totalorder %s90, %s91
      %p105 = scmp.eq.s32.totalorder %s17, 1
      %p106 = por %p104, %p105
      %p108 = scmp.ne.s32.totalorder %s91, %s107
      %p109 = scmp.eq.s32.totalorder %s17, 0
      %p110 = por %p108, %p109
      %p111 = scmp.le.s32.totalorder 1, %s11
      %p112 = scmp.lt.s32.totalorder %s11, 3
      %p113 = pnand %p111, %p112
      %p114 = pneg %p113
      // Predicated region
      $region9: #{_forward_impl.1} parent=5 // pred_check
        _
      $region10: #{_forward_impl.1} parent=5 // pred_check_branch
        %116 = sbr.rel (%p113) target = $region12
      $region11: #{_forward_impl.1} parent=5 // pred_region
        %s117 = ssub.s32 %s11, 1
        // Predicated region
        $region13: #{_forward_impl.1} parent=11 // pred_check
          %p118 = pneg %p49
        $region14: #{_forward_impl.1} parent=11 // pred_check_branch
          %120 = sbr.rel (%p118) target = $region16
        $region15: #{_forward_impl.1} parent=11 // pred_region
          %s121 = smul.u32 2, %s21
          %p122 = scmp.lt.s32.totalorder %s121, 1
          %s123 = scalar_select %p122, %s121, 1
          %s124 = smul.addr %s123, 8
          %s125 = scalar_lea.vmem %s0, %s124
          %s126 = smul.u32 2, %s21
        $region16: #{_forward_impl.1} parent=11 // pred_fallthru
          _
      $region12: #{_forward_impl.1} parent=5 // pred_fallthru
        _
      %p127 = scmp.lt.s32.totalorder %s11, 2
      // Predicated region
      $region17: #{_forward_impl.1} parent=5 // pred_check
        %p128 = pneg %p127
      $region18: #{_forward_impl.1} parent=5 // pred_check_branch
        %130 = sbr.rel (%p128) target = $region20
      $region19: #{_forward_impl.1} parent=5 // pred_region
        // Predicated region
        $region21: #{_forward_impl.1} parent=19 // pred_check
          %p131 = pneg %p69
        $region22: #{_forward_impl.1} parent=19 // pred_check_branch
          %133 = sbr.rel (%p131) target = $region24
        $region23: #{_forward_impl.1} parent=19 // pred_region
          %p134 = scmp.lt.s32.totalorder %s18, 1
          %s135 = scalar_select %p134, %s18, 1
          %s136 = smul.addr %s135, 4
          %s137 = smul.addr %s136, 4
          %s138 = scalar_lea.vmem %s1, %s137
        $region24: #{_forward_impl.1} parent=19 // pred_fallthru
          _
      $region20: #{_forward_impl.1} parent=5 // pred_fallthru
        _
      %p139 = scmp.le.s32.totalorder 1, %s11
      %p140 = scmp.lt.s32.totalorder %s11, 3
      %p141 = pnand %p139, %p140
      %p142 = pneg %p141
      // Predicated region
      $region25: #{_forward_impl.1} parent=5 // pred_check
        _
      $region26: #{_forward_impl.1} parent=5 // pred_check_branch
        %144 = sbr.rel (%p141) target = $region28
      $region27: #{_forward_impl.1} parent=5 // pred_region
        %s145 = ssub.s32 %s11, 1
        %s146 = smul.u32 2, %s21
        %p147 = scmp.lt.s32.totalorder %s146, 1
        %s148 = scalar_select %p147, %s146, 1
        %s149 = smul.addr %s148, 8
        %s150 = scalar_lea.vmem %s0, %s149
        %p151 = pneg %p49
        %p152 = pneg %p46
        %p153 = scmp.lt.s32.totalorder %s20, 1
        %s154 = scalar_select %p153, %s20, 1
        %s155 = smul.addr %s154, 4
        %s156 = smul.addr %s155, 4
        %s157 = scalar_lea.vmem %s1, %s156
        %p158 = pneg %p75
        %p159 = pneg %p72
        %p160 = pneg %p103
        %p161 = pneg %p100
        %s162 = sand.u32 %s90, 1
        %s163 = scalar_lea.sflag [#allocation3], %s162
        %s164 = sand.u32 %s90, 1
        %s165 = smul.addr %s164, 32
        %s166 = scalar_lea.vmem [#allocation2], %s165
        %s167 = smul.u32 2, %s21
        %p168 = scmp.lt.s32.totalorder %s167, 1
        %s169 = scalar_select %p168, %s167, 1
        %s170 = smul.addr %s169, 8
        %s171 = scalar_lea.vmem %s0, %s170
        %s172 = smul.u32 2, %s21
        %p173 = scmp.lt.s32.totalorder %s20, 1
        %s174 = scalar_select %p173, %s20, 1
        %s175 = smul.addr %s174, 4
        %s176 = smul.addr %s175, 4
        %s177 = scalar_lea.vmem %s1, %s176
        %s178 = smul.u32 2, %s21
        %s179 = smul.u32 %s21, 16
        %v180 = vld [vmem:[%s177] sm:$0xff]
        %v181 = vld [vmem:[%s177 + $0x8] sm:$0xff]
        %v184 = vcombine.high %v180, %v180
        %v185 = vcombine.high %v181, %v181
        %vm188 = vcmask 1043456
        %v189 = vsel %vm188, %v180, -inf
        %v190 = vsel %vm188, %v184, -inf
        %v191 = vsel %vm188, %v181, -inf
        %v192 = vsel %vm188, %v185, -inf
        %v193 = vmax.f32 %v189, %v190
        %v194 = vmax.f32 %v191, %v192
        %v195 = vmax.f32 %v193, %v194
        %196 = vmax.xlane.f32.xlu0 %v195
        %v197 = vpop.xlane.xlu0 %196
        %v198 = vlaneseq
        %v199 = vand.u32 %v198, 127
        %v200 = vadd.s32 %v199, 128
        %v201 = vadd.s32 %v199, 256
        %v202 = vadd.s32 %v199, 384
        %v205 = vunpack.c.l.s4 839922192
        %v206 = vunpack.c.0.s8 %v205
        %v207 = vlaneseq
        %v208 = vshrl.u32 %v207, 7
        %v209 = vsub.s32 %v206, %v208
        %v210 = vrot.slane %v197, %v209
        %vm212 = vcmp.eq.f32.partialorder %v180, %v210
        %vm213 = vcmp.eq.f32.partialorder %v181, %v210
        %v214 = vcombine.low %v199, %v200
        %v215 = vcombine.low %v201, %v202
        %v216 = vsel %vm212, %v214, 512
        %v217 = vsel %vm213, %v215, 512
        %v218 = vcombine.high %v216, %v216
        %v219 = vcombine.high %v217, %v217
        %v220 = vsel %vm188, %v216, 2147483647
        %v221 = vsel %vm188, %v218, 2147483647
        %v222 = vsel %vm188, %v217, 2147483647
        %v223 = vsel %vm188, %v219, 2147483647
        %vm224 = vcmp.lt.s32.totalorder %v220, %v221
        %v225 = vsel %vm224, %v220, %v221
        %vm226 = vcmp.lt.s32.totalorder %v222, %v223
        %v227 = vsel %vm226, %v222, %v223
        %vm228 = vcmp.lt.s32.totalorder %v225, %v227
        %v229 = vsel %vm228, %v225, %v227
        %v230 = vand.u32 %v229, 65535
        %v231 = vshra.s32 %v229, 16
        %v232 = vcvt.s32.f32 %v230
        %v233 = vcvt.s32.f32 %v231
        %234 = vmin.xlane.f32.xlu0 %v233
        %v235 = vpop.xlane.xlu0 %234
        %vm236 = vcmp.eq.f32.partialorder %v233, %v235
        %v237 = vsel %vm236, %v232, inf
        %238 = vmin.xlane.f32.xlu0 %v237
        %v239 = vpop.xlane.xlu0 %238
        %v240 = vcvt.f32.s32 %v239
        %v241 = vcvt.f32.s32 %v235
        %v242 = vshll.u32 %v241, 16
        %v243 = vadd.s32 %v242, %v240
        %v244 = vld [vmem:[%s171] sm:$0xff]
        %v245 = vld [vmem:[%s171 + $0x8] sm:$0xff]
        %v246 = vlaneseq
        %v247 = vshrl.u32 %v246, 7
        %v248 = vadd.s32 %v247, 8
        %v249 = vstv %s179
        %v250 = vadd.s32 %v249, %v247
        %v251 = vadd.s32 %v249, %v248
        %v252 = vsub.s32 %v250, 4
        %v253 = vsub.s32 %v251, 4
        %vm254 = vcmp.eq.s32.totalorder %v252, 0
        %vm255 = vcmp.eq.s32.totalorder %v253, 0
        %v256 = vlaneseq
        %v257 = vshrl.u32 %v256, 7
        %v258 = vsub.s32 0, %v257
        %v259 = vrot.slane %v243, %v258
        %v260 = vsel %vm254, %v259, %v244
        %v261 = vsel %vm255, %v259, %v245
        %vm262 = vcmp.eq.s32.totalorder %v252, 1
        %vm263 = vcmp.eq.s32.totalorder %v253, 1
        %v264 = vlaneseq
        %v265 = vshrl.u32 %v264, 7
        %v266 = vsub.s32 1, %v265
        %v267 = vrot.slane %v243, %v266
        %v268 = vsel %vm262, %v267, %v260
        %v269 = vsel %vm263, %v267, %v261
        %vm270 = vcmp.eq.s32.totalorder %v252, 2
        %vm271 = vcmp.eq.s32.totalorder %v253, 2
        %v272 = vlaneseq
        %v273 = vshrl.u32 %v272, 7
        %v274 = vsub.s32 2, %v273
        %v275 = vrot.slane %v243, %v274
        %v276 = vsel %vm270, %v275, %v268
        %v277 = vsel %vm271, %v275, %v269
        %vm278 = vcmp.eq.s32.totalorder %v252, 3
        %vm279 = vcmp.eq.s32.totalorder %v253, 3
        %v280 = vlaneseq
        %v281 = vshrl.u32 %v280, 7
        %v282 = vsub.s32 3, %v281
        %v283 = vrot.slane %v243, %v282
        %v284 = vsel %vm278, %v283, %v276
        %v285 = vsel %vm279, %v283, %v277
        %286 = vset.pattern.permute.xlu0 0
        %287 = vperm.xlu0 %286, %v284
        %v288 = vpop.permute.xlu0 %287
        %289 = vset.pattern.permute.xlu0 0
        %290 = vperm.xlu0 %289, %v285
        %v291 = vpop.permute.xlu0 %290
        %vm292 = vcmp.eq.s32.totalorder %v199, %v288
        %vm293 = vcmp.eq.s32.totalorder %v200, %v288
        %vm294 = vcmp.eq.s32.totalorder %v201, %v288
        %vm295 = vcmp.eq.s32.totalorder %v202, %v288
        %vm296 = vcmp.eq.s32.totalorder %v199, %v291
        %vm297 = vcmp.eq.s32.totalorder %v200, %v291
        %vm298 = vcmp.eq.s32.totalorder %v201, %v291
        %vm299 = vcmp.eq.s32.totalorder %v202, %v291
        %v300 = vsel %vm292, 1, 0
        %v301 = vsel %vm293, 1, 0
        %v302 = vsel %vm294, 1, 0
        %v303 = vsel %vm295, 1, 0
        %v304 = vsel %vm296, 1, 0
        %v305 = vsel %vm297, 1, 0
        %v306 = vsel %vm298, 1, 0
        %v307 = vsel %vm299, 1, 0
        %v308 = vcvt.s32.f32 %v300
        %v309 = vcvt.s32.f32 %v301
        %v310 = vcvt.s32.f32 %v302
        %v311 = vcvt.s32.f32 %v303
        %v312 = vcvt.s32.f32 %v304
        %v313 = vcvt.s32.f32 %v305
        %v314 = vcvt.s32.f32 %v306
        %v315 = vcvt.s32.f32 %v307
        %v316 = vpack.c.bf16 %v312, %v308
        %v317 = vpack.c.bf16 %v313, %v309
        %v318 = vpack.c.bf16 %v314, %v310
        %v319 = vpack.c.bf16 %v315, %v311
        %v324 = vunpack.c.l.b16 %v316
        %v325 = vunpack.c.l.b16 %v317
        %v326 = vunpack.c.l.b16 %v318
        %v327 = vunpack.c.l.b16 %v319
        %v328 = vunpack.c.h.b16 %v316
        %v329 = vunpack.c.h.b16 %v317
        %v330 = vunpack.c.h.b16 %v318
        %v331 = vunpack.c.h.b16 %v319
        %v332 = vpack.c.b16 %v325, %v324
        %v333 = vpack.c.b16 %v327, %v326
        %v334 = vpack.c.b16 %v329, %v328
        %v335 = vpack.c.b16 %v331, %v330
        %340 = vst [vmem:[%s166] sm:$0xff] %v332
        %341 = vst [vmem:[%s166 + $0x8] sm:$0xff] %v333
        %342 = vst [vmem:[%s166 + $0x10] sm:$0xff] %v334
        %343 = vst [vmem:[%s166 + $0x18] sm:$0xff] %v335
        %s344 = sand.u32 %s90, 1
        %s345 = scalar_lea.sflag [#allocation3], %s344
        %s346 = sand.u32 %s90, 1
        %s347 = smul.addr %s346, 32
        %s348 = scalar_lea.vmem [#allocation2], %s347
        // Predicated region
        $region29: #{_forward_impl.1} parent=27 // pred_check
          %p349 = pneg %p100
        $region30: #{_forward_impl.1} parent=27 // pred_check_branch
          %351 = sbr.rel (%p349) target = $region32
        $region31: #{_forward_impl.1} parent=27 // pred_region
          %s352 = smul.u32 2, %s21
          %s354 = ssub.s32 512, 512
          %355 = vsyncadd %s345, %s354
          %s356 = smul.addr %s352, 4
          %s357 = smul.addr %s20, 8
          %s358 = sadd.s32 %s356, %s357
          %s359 = smul.addr %s358, 64
          %s360 = scalar_lea.hbm %s2, %s359
          %s361 = sshll.u32 %s348, 4
          %s362 = int_to_ptr.vmem [resolvable:$true] %s361
          %367 = dma.vmem_to_hbm [thread:$0]  %s362, 512, %s360, %s345, 256, 256, 16
        $region32: #{_forward_impl.1} parent=27 // pred_fallthru
          _
      $region28: #{_forward_impl.1} parent=5 // pred_fallthru
        _
      %p368 = scmp.le.s32.totalorder 2, %s11
      // Predicated region
      $region33: #{_forward_impl.1} parent=5 // pred_check
        %p369 = pneg %p368
      $region34: #{_forward_impl.1} parent=5 // pred_check_branch
        %371 = sbr.rel (%p369) target = $region36
      $region35: #{_forward_impl.1} parent=5 // pred_region
        %s372 = ssub.s32 %s11, 2
        // Predicated region
        $region37: #{_forward_impl.1} parent=35 // pred_check
          %p373 = pneg %p106
        $region38: #{_forward_impl.1} parent=35 // pred_check_branch
          %375 = sbr.rel (%p373) target = $region40
        $region39: #{_forward_impl.1} parent=35 // pred_region
          %s376 = sand.u32 %s91, 1
          %s377 = scalar_lea.sflag [#allocation3], %s376
          %s378 = sand.u32 %s91, 1
          %s379 = smul.addr %s378, 32
          %s380 = scalar_lea.vmem [#allocation2], %s379
          %381 = dma.done %s377, 512
        $region40: #{_forward_impl.1} parent=35 // pred_fallthru
          _
      $region36: #{_forward_impl.1} parent=5 // pred_fallthru
        _
    $region6: #{_forward_impl.1} parent=1 // loop_footer
      %s15 = sadd.s32 1, %s11
    $region7: #{_forward_impl.1} parent=1 // loop_footer_branch
      %10 = sbr.rel target = $region3
    $region8: #{_forward_impl.1} parent=1 // loop_exit
      _
    %382 = vsyncpa [#allocation3], 1
    %s383 = scalar_lea.sflag [#allocation3], 1
    %384 = vsyncpa %s383, 1

</llo_original>
